<compile_context>
chip_gen: v7x
topology: tpu7x:2x2x1
jax: 0.10.0
libtpu: 0.0.40
codegen_flags: <defaults>
</compile_context>

<pallas_src>
import functools

import jax
import jax.numpy as jnp
from jax.experimental import pallas as pl
from jax.experimental.pallas import tpu as pltpu


def _round_up(x, m):
    return (x + m - 1) // m * m


# --------------------------------- kernels ----------------------------------

def _mean_pool_kernel(x_ref, o_ref, acc_ref, *, seq_len, inv_t, needs_mask):
    # x_ref  : (tm, tT, K)   one sequence chunk of one row tile
    # o_ref  : (tm, K)       pooled activations (compute dtype)
    # acc_ref: (tm, K) f32   running sum over sequence chunks
    t = pl.program_id(1)

    @pl.when(t == 0)
    def _():
        acc_ref[...] = jnp.zeros_like(acc_ref)

    xv = x_ref[...].astype(jnp.float32)
    if needs_mask:  # last sequence chunk may be partial
        pos = t * x_ref.shape[1] + jax.lax.broadcasted_iota(
            jnp.int32, (1, x_ref.shape[1], 1), 1)
        xv = jnp.where(pos < seq_len, xv, 0.0)
    acc_ref[...] += jnp.sum(xv, axis=1)

    @pl.when(t == pl.num_programs(1) - 1)
    def _():
        o_ref[...] = (acc_ref[...] * inv_t).astype(o_ref.dtype)


def _mlp_kernel(xm_ref, w1_ref, b1_ref, w2_ref, b2_ref, o_ref, acc_ref):
    # xm_ref: (tm, K)   pooled rows (compute dtype; resident across k)
    # w1_ref: (K, tk)   b1_ref: (1, tk) f32
    # w2_ref: (tk, Np)  b2_ref: (1, Np) f32
    # o_ref : (tm, Np)  acc_ref: (tm, Np) f32
    k = pl.program_id(1)

    @pl.when(k == 0)
    def _():
        acc_ref[...] = jnp.zeros_like(acc_ref)

    h = jnp.dot(xm_ref[...], w1_ref[...], preferred_element_type=jnp.float32)
    h = jnp.maximum(h + b1_ref[...], 0.0)                 # bias + ReLU in f32
    acc_ref[...] += jnp.dot(h.astype(w2_ref.dtype), w2_ref[...],
                            preferred_element_type=jnp.float32)

    @pl.when(k == pl.num_programs(1) - 1)
    def _():
        o_ref[...] = (acc_ref[...] + b2_ref[...]).astype(o_ref.dtype)


# --------------------------------- wrapper ----------------------------------

def _vmem_capacity_bytes():
    try:
        cap = getattr(pltpu.get_tpu_info(), "vmem_capacity_bytes", None)
        if cap:
            return int(cap)
    except Exception:
        pass
    return 64 * 1024 * 1024          # conservative default (v7x-sized)


def prepare_classifier_params(w1, b1, w2, b2, *, compute_dtype=jnp.bfloat16):
    """Pad (hidden / output dims only) and cast weights ONCE, outside the
    per-call path.  The input-feature dim K is never padded (full-dim blocks)."""
    n_input, n_hidden = w1.shape
    n_output = w2.shape[1]
    Hp = _round_up(n_hidden, 128)
    Np = _round_up(n_output, 128)
    w1p = jnp.pad(w1, ((0, 0), (0, Hp - n_hidden))).astype(compute_dtype)
    b1p = jnp.pad(b1, (0, Hp - n_hidden)).astype(jnp.float32).reshape(1, Hp)
    w2p = jnp.pad(w2, ((0, Hp - n_hidden), (0, Np - n_output))).astype(compute_dtype)
    b2p = jnp.pad(b2, (0, Np - n_output)).astype(jnp.float32).reshape(1, Np)
    return {"w1": w1p, "b1": b1p, "w2": w2p, "b2": b2p, "n_output": n_output}


@functools.partial(jax.jit, static_argnames=("n_output", "tk_cap"))
def classifier_forward(x, w1p, b1p, w2p, b2p, *, n_output, tk_cap=None):
    B, T, K = x.shape
    Hp = w1p.shape[1]
    Np = w2p.shape[1]
    cdt = w1p.dtype
    out_dtype = x.dtype
    cdt_b = jnp.dtype(cdt).itemsize
    out_b = jnp.dtype(out_dtype).itemsize
    x_b = jnp.dtype(x.dtype).itemsize

    # ---- per-generation VMEM budget (v5e/v6e: 128 MiB phys, v7x: 64 MiB) ----
    vmem_cap = _vmem_capacity_bytes()
    vmem_limit = int(vmem_cap * 3 // 4)            # ~96 MiB / ~48 MiB
    budget = int(vmem_limit * 0.8)                 # headroom for internal scratch
    small_vmem = vmem_cap <= 96 * 1024 * 1024      # v7x-like part

    # ---- batch padding only up to sublane/packing alignment (usually a no-op) ----
    row_align = 16 if cdt_b < 4 else 8
    Mp = _round_up(B, row_align)
    if Mp > B:                                     # skipped for aligned batches
        x = jnp.pad(x, ((0, Mp - B), (0, 0), (0, 0)))

    # ---- hidden tile: collapse the whole reduction when it fits VMEM ----
    def streamed_bytes(tk_):
        # double-buffered per-k operands (W1 col tile, W2 row tile, b1) + b2
        return 2 * (K * tk_ + tk_ * Np) * cdt_b + 2 * tk_ * 4 + 2 * Np * 4

    tk = 128
    tk_lim = Hp if tk_cap is None else min(Hp, _round_up(tk_cap, 128))
    for c in range(Hp // 128, 0, -1):
        cand = c * 128
        if Hp % cand:
            continue
        if cand <= tk_lim and streamed_bytes(cand) <= budget // 2:
            tk = cand
            break

    # ---- row tile: as large as remaining VMEM allows; >=2 tiles on v7x ----
    tm_cap = 256 if small_vmem else 512

    def mlp_fits(tm_):
        tm_dep = 2 * tm_ * K * cdt_b + 2 * tm_ * Np * out_b + tm_ * Np * 4
        return streamed_bytes(tk) + tm_dep <= budget

    cands = [c for c in range(min(tm_cap, Mp), row_align - 1, -row_align)
             if Mp % c == 0]
    tm = next((c for c in cands if mlp_fits(c)), cands[-1])
    if small_vmem and Mp // tm == 1:
        # split the batch across the two v7x TensorCores when possible
        tm = next((c for c in cands if Mp // c >= 2 and mlp_fits(c)), tm)

    # ---- sequence chunk for the pooling kernel (streams T; never pads x) ----
    tT = T
    while 2 * tm * tT * K * x_b + tm * K * (4 + 2 * cdt_b) > budget and tT > 8:
        tT = max(8, _round_up(tT // 2, 8))
    nT = pl.cdiv(T, tT)

    # --------------- stage 1: mean over the sequence dim (f32 sum) ---------------
    pooled = pl.pallas_call(
        functools.partial(_mean_pool_kernel, seq_len=T, inv_t=1.0 / T,
                          needs_mask=(nT * tT != T)),
        out_shape=jax.ShapeDtypeStruct((Mp, K), cdt),
        grid=(Mp // tm, nT),
        in_specs=[pl.BlockSpec((tm, tT, K), lambda i, t: (i, t, 0))],
        out_specs=pl.BlockSpec((tm, K), lambda i, t: (i, 0)),
        scratch_shapes=[pltpu.VMEM((tm, K), jnp.float32)],
        compiler_params=pltpu.CompilerParams(
            dimension_semantics=("parallel", "arbitrary"),
            vmem_limit_bytes=vmem_limit),
    )(x)

    # --------------- stage 2: fused Linear -> ReLU -> Linear ---------------
    n_row = Mp // tm
    flops = 2 * Mp * K * Hp + 2 * Mp * Hp * Np
    bytes_accessed = int(Mp * K * cdt_b
                         + n_row * (K * Hp + Hp * Np) * cdt_b
                         + n_row * (Hp + Np) * 4
                         + Mp * Np * out_b)

    out_p = pl.pallas_call(
        _mlp_kernel,
        out_shape=jax.ShapeDtypeStruct((Mp, Np), out_dtype),
        grid=(Mp // tm, Hp // tk),
        in_specs=[
            pl.BlockSpec((tm, K), lambda i, k: (i, 0)),    # pooled rows (resident over k)
            pl.BlockSpec((K, tk), lambda i, k: (0, k)),    # W1 column tile (streamed)
            pl.BlockSpec((1, tk), lambda i, k: (0, k)),    # b1 tile
            pl.BlockSpec((tk, Np), lambda i, k: (k, 0)),   # W2 row tile (streamed)
            pl.BlockSpec((1, Np), lambda i, k: (0, 0)),    # b2 (resident)
        ],
        out_specs=pl.BlockSpec((tm, Np), lambda i, k: (i, 0)),
        scratch_shapes=[pltpu.VMEM((tm, Np), jnp.float32)],  # f32 output accumulator
        compiler_params=pltpu.CompilerParams(
            dimension_semantics=("parallel", "arbitrary"),
            vmem_limit_bytes=vmem_limit),
        cost_estimate=pl.CostEstimate(flops=flops, transcendentals=0,
                                      bytes_accessed=bytes_accessed),
    )(pooled, w1p, b1p, w2p, b2p)

    return out_p[:B, :n_output]


# --------------------------------- test -------------------------------------

def _init_params(key, n_input, n_hidden, n_output):
    """PyTorch-default-like init; weights stored as (in, out)."""
    k1, k2, k3, k4 = jax.random.split(key, 4)
    lim1 = 1.0 / jnp.sqrt(n_input)
    lim2 = 1.0 / jnp.sqrt(n_hidden)
    w1 = jax.random.uniform(k1, (n_input, n_hidden), jnp.float32, -lim1, lim1)
    b1 = jax.random.uniform(k2, (n_hidden,), jnp.float32, -lim1, lim1)
    w2 = jax.random.uniform(k3, (n_hidden, n_output), jnp.float32, -lim2, lim2)
    b2 = jax.random.uniform(k4, (n_output,), jnp.float32, -lim2, lim2)
    return w1, b1, w2, b2


def _reference(x, w1, b1, w2, b2):
    xm = jnp.mean(x, axis=1)
    return jnp.maximum(xm @ w1 + b1, 0.0) @ w2 + b2


if __name__ == "__main__":
    key = jax.random.PRNGKey(0)
    kx1, kp1, kx2, kp2 = jax.random.split(key, 4)

    # ----- config 1: tiny shapes, f32 compute (tight tolerance), single k step -----
    B, T, NI, NH, NO = 2, 8, 32, 64, 10
    x = jax.random.normal(kx1, (B, T, NI), jnp.float32)
    w1, b1, w2, b2 = _init_params(kp1, NI, NH, NO)
    p = prepare_classifier_params(w1, b1, w2, b2, compute_dtype=jnp.float32)
    out = jax.block_until_ready(
        classifier_forward(x, p["w1"], p["b1"], p["w2"], p["b2"],
                           n_output=p["n_output"]))
    ref = _reference(x, w1, b1, w2, b2)
    assert out.shape == (B, NO)
    assert jnp.allclose(out, ref, atol=1e-5, rtol=1e-5), "mismatch (cfg 1, f32)"

    # ----- config 2: multiple hidden-reduction grid steps (tk capped at 128) -----
    B2, T2, NI2, NH2, NO2 = 4, 8, 48, 256, 10
    x2 = jax.random.normal(kx2, (B2, T2, NI2), jnp.float32)
    w12, b12, w22, b22 = _init_params(kp2, NI2, NH2, NO2)
    p2 = prepare_classifier_params(w12, b12, w22, b22, compute_dtype=jnp.float32)
    out2 = jax.block_until_ready(
        classifier_forward(x2, p2["w1"], p2["b1"], p2["w2"], p2["b2"],
                           n_output=p2["n_output"], tk_cap=128))
    ref2 = _reference(x2, w12, b12, w22, b22)
    assert out2.shape == (B2, NO2)
    assert jnp.allclose(out2, ref2, atol=1e-5, rtol=1e-5), "mismatch (cfg 2, f32)"

    # ----- config 3: default bf16 MXU operands (f32 mean, f32 accumulation) -----
    p3 = prepare_classifier_params(w1, b1, w2, b2)   # compute_dtype=bfloat16 default
    out3 = jax.block_until_ready(
        classifier_forward(x, p3["w1"], p3["b1"], p3["w2"], p3["b2"],
                           n_output=p3["n_output"]))
    assert jnp.allclose(out3.astype(jnp.float32), ref, atol=3e-2, rtol=3e-2), \
        "mismatch (cfg 3, bf16)"

    print("KERNEL_OK")
</pallas_src>

<mosaic_0001>
module attributes {stable_mosaic.version = 11 : i64} {
  func.func @_mlp_kernel(%arg0: i32, %arg1: i32, %arg2: memref<8x32xf32, #tpu.memory_space<vmem>>, %arg3: memref<32x128xf32, #tpu.memory_space<vmem>>, %arg4: memref<1x128xf32, #tpu.memory_space<vmem>>, %arg5: memref<128x128xf32, #tpu.memory_space<vmem>>, %arg6: memref<1x128xf32, #tpu.memory_space<vmem>>, %arg7: memref<8x128xf32, #tpu.memory_space<vmem>>, %arg8: memref<8x128xf32, #tpu.memory_space<vmem>>) attributes {dimension_semantics = [#tpu.dimension_semantics<parallel>, #tpu.dimension_semantics<arbitrary>], iteration_bounds = array<i64: 1, 1>, scalar_prefetch = 0 : i64, scratch_operands = 1 : i64, tpu.core_type = #tpu.core_type<tc>, window_params = [{transform_indices = @transform_0, window_bounds = array<i64: 8, 32>}, {transform_indices = @transform_1, window_bounds = array<i64: 32, 128>}, {transform_indices = @transform_2, window_bounds = array<i64: 1, 128>}, {transform_indices = @transform_3, window_bounds = array<i64: 128, 128>}, {pipeline_mode = #tpu.pipeline_mode<synchronous>, transform_indices = @transform_4, window_bounds = array<i64: 1, 128>}, {transform_indices = @transform_5, window_bounds = array<i64: 8, 128>}]} {
    %c0_i32 = arith.constant 0 : i32
    %0 = arith.cmpi eq, %arg1, %c0_i32 : i32
    %1 = arith.extui %0 : i1 to i32
    %c0_i32_0 = arith.constant 0 : i32
    %2 = arith.cmpi ne, %1, %c0_i32_0 : i32
    scf.if %2 {
      %cst_16 = arith.constant 0.000000e+00 : f32
      %19 = vector.broadcast %cst_16 : f32 to vector<8x128xf32>
      %c0_17 = arith.constant 0 : index
      %c0_18 = arith.constant 0 : index
      %20 = vector.load %arg8[%c0_17, %c0_18] : memref<8x128xf32, #tpu.memory_space<vmem>>, vector<8x128xf32>
      tpu.vector_store %arg8[%c0_17, %c0_18], %19 {strides = array<i32>} : memref<8x128xf32, #tpu.memory_space<vmem>>, vector<8x128xf32>,
    } else {
    }
    %c0 = arith.constant 0 : index
    %c0_1 = arith.constant 0 : index
    %3 = vector.load %arg2[%c0, %c0_1] : memref<8x32xf32, #tpu.memory_space<vmem>>, vector<8x32xf32>
    %c0_2 = arith.constant 0 : index
    %c0_3 = arith.constant 0 : index
    %4 = vector.load %arg3[%c0_2, %c0_3] : memref<32x128xf32, #tpu.memory_space<vmem>>, vector<32x128xf32>
    %cst = arith.constant dense<0.000000e+00> : vector<8x128xf32>
    %5 = tpu.matmul %3, %4, %cst {dimension_numbers = #tpu.dot_dimension_numbers<[1], [0], [0], [1], [0, 0, 1, 1], [], []>} : vector<8x32xf32>, vector<32x128xf32>, vector<8x128xf32> -> vector<8x128xf32>
    %c0_4 = arith.constant 0 : index
    %c0_5 = arith.constant 0 : index
    %6 = vector.load %arg4[%c0_4, %c0_5] : memref<1x128xf32, #tpu.memory_space<vmem>>, vector<1x128xf32>
    %7 = vector.broadcast %6 : vector<1x128xf32> to vector<8x128xf32>
    %8 = arith.addf %5, %7 : vector<8x128xf32>
    %cst_6 = arith.constant 0.000000e+00 : f32
    %9 = vector.broadcast %cst_6 : f32 to vector<8x128xf32>
    %10 = arith.maximumf %8, %9 : vector<8x128xf32>
    %c0_7 = arith.constant 0 : index
    %c0_8 = arith.constant 0 : index
    %11 = vector.load %arg8[%c0_7, %c0_8] : memref<8x128xf32, #tpu.memory_space<vmem>>, vector<8x128xf32>
    %c0_9 = arith.constant 0 : index
    %c0_10 = arith.constant 0 : index
    %12 = vector.load %arg5[%c0_9, %c0_10] : memref<128x128xf32, #tpu.memory_space<vmem>>, vector<128x128xf32>
    %cst_11 = arith.constant dense<0.000000e+00> : vector<8x128xf32>
    %13 = tpu.matmul %10, %12, %cst_11 {dimension_numbers = #tpu.dot_dimension_numbers<[1], [0], [0], [1], [0, 0, 1, 1], [], []>} : vector<8x128xf32>, vector<128x128xf32>, vector<8x128xf32> -> vector<8x128xf32>
    %14 = arith.addf %11, %13 : vector<8x128xf32>
    %c0_12 = arith.constant 0 : index
    %c0_13 = arith.constant 0 : index
    %15 = vector.load %arg8[%c0_12, %c0_13] : memref<8x128xf32, #tpu.memory_space<vmem>>, vector<8x128xf32>
    tpu.vector_store %arg8[%c0_12, %c0_13], %14 {strides = array<i32>} : memref<8x128xf32, #tpu.memory_space<vmem>>, vector<8x128xf32>,
    %c0_i32_14 = arith.constant 0 : i32
    %16 = arith.cmpi eq, %arg1, %c0_i32_14 : i32
    %17 = arith.extui %16 : i1 to i32
    %c0_i32_15 = arith.constant 0 : i32
    %18 = arith.cmpi ne, %17, %c0_i32_15 : i32
    scf.if %18 {
      %c0_16 = arith.constant 0 : index
      %c0_17 = arith.constant 0 : index
      %19 = vector.load %arg8[%c0_16, %c0_17] : memref<8x128xf32, #tpu.memory_space<vmem>>, vector<8x128xf32>
      %c0_18 = arith.constant 0 : index
      %c0_19 = arith.constant 0 : index
      %20 = vector.load %arg6[%c0_18, %c0_19] : memref<1x128xf32, #tpu.memory_space<vmem>>, vector<1x128xf32>
      %21 = vector.broadcast %20 : vector<1x128xf32> to vector<8x128xf32>
      %22 = arith.addf %19, %21 : vector<8x128xf32>
      %c0_20 = arith.constant 0 : index
      %c0_21 = arith.constant 0 : index
      %23 = vector.load %arg7[%c0_20, %c0_21] : memref<8x128xf32, #tpu.memory_space<vmem>>, vector<8x128xf32>
      tpu.vector_store %arg7[%c0_20, %c0_21], %22 {strides = array<i32>} : memref<8x128xf32, #tpu.memory_space<vmem>>, vector<8x128xf32>,
    } else {
    }
    return
  }
  func.func @transform_0(%arg0: i32, %arg1: i32) -> (i32, i32) {
    %c0_i32 = arith.constant 0 : i32
    %c0_i32_0 = arith.constant 0 : i32
    return %arg0, %c0_i32 : i32, i32
  }
  func.func @transform_1(%arg0: i32, %arg1: i32) -> (i32, i32) {
    %c0_i32 = arith.constant 0 : i32
    %c0_i32_0 = arith.constant 0 : i32
    return %c0_i32, %arg1 : i32, i32
  }
  func.func @transform_2(%arg0: i32, %arg1: i32) -> (i32, i32) {
    %c0_i32 = arith.constant 0 : i32
    %c0_i32_0 = arith.constant 0 : i32
    return %c0_i32, %arg1 : i32, i32
  }
  func.func @transform_3(%arg0: i32, %arg1: i32) -> (i32, i32) {
    %c0_i32 = arith.constant 0 : i32
    %c0_i32_0 = arith.constant 0 : i32
    return %arg1, %c0_i32 : i32, i32
  }
  func.func @transform_4(%arg0: i32, %arg1: i32) -> (i32, i32) {
    %c0_i32 = arith.constant 0 : i32
    %c0_i32_0 = arith.constant 0 : i32
    %c0_i32_1 = arith.constant 0 : i32
    return %c0_i32, %c0_i32_0 : i32, i32
  }
  func.func @transform_5(%arg0: i32, %arg1: i32) -> (i32, i32) {
    %c0_i32 = arith.constant 0 : i32
    %c0_i32_0 = arith.constant 0 : i32
    return %arg0, %c0_i32 : i32, i32
  }
}

module attributes {stable_mosaic.version = 11 : i64} {
  func.func @_mean_pool_kernel(%arg0: i32, %arg1: i32, %arg2: memref<8x8x32xf32, #tpu.memory_space<vmem>>, %arg3: memref<8x32xf32, #tpu.memory_space<vmem>>, %arg4: memref<8x32xf32, #tpu.memory_space<vmem>>) attributes {dimension_semantics = [#tpu.dimension_semantics<parallel>, #tpu.dimension_semantics<arbitrary>], iteration_bounds = array<i64: 1, 1>, scalar_prefetch = 0 : i64, scratch_operands = 1 : i64, tpu.core_type = #tpu.core_type<tc>, window_params = [{transform_indices = @transform_0, window_bounds = array<i64: 8, 8, 32>}, {transform_indices = @transform_1, window_bounds = array<i64: 8, 32>}]} {
    %c0_i32 = arith.constant 0 : i32
    %0 = arith.cmpi eq, %arg1, %c0_i32 : i32
    %1 = arith.extui %0 : i1 to i32
    %c0_i32_0 = arith.constant 0 : i32
    %2 = arith.cmpi ne, %1, %c0_i32_0 : i32
    scf.if %2 {
      %cst_9 = arith.constant 0.000000e+00 : f32
      %11 = vector.broadcast %cst_9 : f32 to vector<8x32xf32>
      %c0_10 = arith.constant 0 : index
      %c0_11 = arith.constant 0 : index
      %12 = vector.load %arg4[%c0_10, %c0_11] : memref<8x32xf32, #tpu.memory_space<vmem>>, vector<8x32xf32>
      tpu.vector_store %arg4[%c0_10, %c0_11], %11 {strides = array<i32>} : memref<8x32xf32, #tpu.memory_space<vmem>>, vector<8x32xf32>,
    } else {
    }
    %c0 = arith.constant 0 : index
    %c0_1 = arith.constant 0 : index
    %c0_2 = arith.constant 0 : index
    %3 = vector.load %arg2[%c0, %c0_1, %c0_2] : memref<8x8x32xf32, #tpu.memory_space<vmem>>, vector<8x8x32xf32>
    %c0_3 = arith.constant 0 : index
    %c0_4 = arith.constant 0 : index
    %4 = vector.load %arg4[%c0_3, %c0_4] : memref<8x32xf32, #tpu.memory_space<vmem>>, vector<8x32xf32>
    %cst = arith.constant dense<0.000000e+00> : vector<8x32xf32>
    %5 = vector.multi_reduction <add>, %3, %cst [1] : vector<8x8x32xf32> to vector<8x32xf32>
    %6 = arith.addf %4, %5 : vector<8x32xf32>
    %c0_5 = arith.constant 0 : index
    %c0_6 = arith.constant 0 : index
    %7 = vector.load %arg4[%c0_5, %c0_6] : memref<8x32xf32, #tpu.memory_space<vmem>>, vector<8x32xf32>
    tpu.vector_store %arg4[%c0_5, %c0_6], %6 {strides = array<i32>} : memref<8x32xf32, #tpu.memory_space<vmem>>, vector<8x32xf32>,
    %c0_i32_7 = arith.constant 0 : i32
    %8 = arith.cmpi eq, %arg1, %c0_i32_7 : i32
    %9 = arith.extui %8 : i1 to i32
    %c0_i32_8 = arith.constant 0 : i32
    %10 = arith.cmpi ne, %9, %c0_i32_8 : i32
    scf.if %10 {
      %c0_9 = arith.constant 0 : index
      %c0_10 = arith.constant 0 : index
      %11 = vector.load %arg4[%c0_9, %c0_10] : memref<8x32xf32, #tpu.memory_space<vmem>>, vector<8x32xf32>
      %cst_11 = arith.constant 1.250000e-01 : f32
      %12 = vector.broadcast %cst_11 : f32 to vector<8x32xf32>
      %13 = arith.mulf %11, %12 : vector<8x32xf32>
      %c0_12 = arith.constant 0 : index
      %c0_13 = arith.constant 0 : index
      %14 = vector.load %arg3[%c0_12, %c0_13] : memref<8x32xf32, #tpu.memory_space<vmem>>, vector<8x32xf32>
      tpu.vector_store %arg3[%c0_12, %c0_13], %13 {strides = array<i32>} : memref<8x32xf32, #tpu.memory_space<vmem>>, vector<8x32xf32>,
    } else {
    }
    return
  }
  func.func @transform_0(%arg0: i32, %arg1: i32) -> (i32, i32, i32) {
    %c0_i32 = arith.constant 0 : i32
    %c0_i32_0 = arith.constant 0 : i32
    return %arg0, %arg1, %c0_i32 : i32, i32, i32
  }
  func.func @transform_1(%arg0: i32, %arg1: i32) -> (i32, i32) {
    %c0_i32 = arith.constant 0 : i32
    %c0_i32_0 = arith.constant 0 : i32
    return %arg0, %c0_i32 : i32, i32
  }
}

</mosaic_0001>

<llo_original>
// kernel: classifier_forward.2
$region0: #{classifier_forward.2}
  #allocation0 [shape = 'u32[]', space=smem, size = 0x4, offset = 0x4, fixed_abs, tag = 'smem constant byte address 0x4 - core index']
  #allocation1 [shape = 'u32[144,128]{1,0:T(1,128)}', space=vmem, size = 0x12000, scoped, tag = 'internal scratch']
  #allocation2 [shape = 'f32[8,32]{1,0:T(8,128)}', space=vmem, size = 0x1000, scoped, tag = 'scratch operand']
  %s0 = inlined_call_operand.vmem [shape: f32[8,8,32], index: 0, kind: input, shape index: {}]
  %s1 = inlined_call_operand.vmem [shape: f32[8,32], index: 1, kind: output, shape index: {}]
  %s2 = sld [smem:[#allocation0]]
  $region22: #{classifier_forward.2} parent=0
    _
  %s4 = ssub.s32 1, %s2
  %s5 = scalar_select 0, %s4, %s2
  // Predicated region
  $region2: #{classifier_forward.2} parent=0 // pred_check
    _
  $region3: #{classifier_forward.2} parent=0 // pred_check_branch
    %7 = sbr.rel (0) target = $region5
  $region4: #{classifier_forward.2} parent=0 // pred_region
    _
  $region5: #{classifier_forward.2} parent=0 // pred_fallthru
    _
  %p8 = scmp.eq.s32.totalorder 0, 0
  // Predicated region
  $region6: #{classifier_forward.2} parent=0 // pred_check
    %p9 = pneg %p8
  $region7: #{classifier_forward.2} parent=0 // pred_check_branch
    %11 = sbr.rel (%p9) target = $region9
  $region8: #{classifier_forward.2} parent=0 // pred_region
    %vm12 = vcmask 261120
    %13 = vst.msk [vmem:[#allocation2] sm:$0xff] %vm12, 0.0
  $region9: #{classifier_forward.2} parent=0 // pred_fallthru
    _
  %v14 = vld [vmem:[%s0] sm:$0xff]
  %v15 = vld [vmem:[%s0 + $0x8] sm:$0xff]
  %v16 = vld [vmem:[%s0 + $0x10] sm:$0xff]
  %v17 = vld [vmem:[%s0 + $0x18] sm:$0xff]
  %v18 = vld [vmem:[%s0 + $0x20] sm:$0xff]
  %v19 = vld [vmem:[%s0 + $0x28] sm:$0xff]
  %v20 = vld [vmem:[%s0 + $0x30] sm:$0xff]
  %v21 = vld [vmem:[%s0 + $0x38] sm:$0xff]
  %v22 = vld [vmem:[#allocation2] sm:$0xff]
  %vm23 = vcmask 261120
  %v24 = vsel %vm23, %v14, 0.0
  %v25 = vrot.slane %v24, 4
  %v26 = vadd.f32 %v24, %v25
  %v27 = vrot.slane %v26, 2
  %v28 = vadd.f32 %v26, %v27
  %v29 = vrot.slane %v28, 1
  %v30 = vadd.f32 %v28, %v29
  %v31 = vsel %vm23, %v15, 0.0
  %v32 = vrot.slane %v31, 4
  %v33 = vadd.f32 %v31, %v32
  %v34 = vrot.slane %v33, 2
  %v35 = vadd.f32 %v33, %v34
  %v36 = vrot.slane %v35, 1
  %v37 = vadd.f32 %v35, %v36
  %v38 = vsel %vm23, %v16, 0.0
  %v39 = vrot.slane %v38, 4
  %v40 = vadd.f32 %v38, %v39
  %v41 = vrot.slane %v40, 2
  %v42 = vadd.f32 %v40, %v41
  %v43 = vrot.slane %v42, 1
  %v44 = vadd.f32 %v42, %v43
  %v45 = vsel %vm23, %v17, 0.0
  %v46 = vrot.slane %v45, 4
  %v47 = vadd.f32 %v45, %v46
  %v48 = vrot.slane %v47, 2
  %v49 = vadd.f32 %v47, %v48
  %v50 = vrot.slane %v49, 1
  %v51 = vadd.f32 %v49, %v50
  %v52 = vsel %vm23, %v18, 0.0
  %v53 = vrot.slane %v52, 4
  %v54 = vadd.f32 %v52, %v53
  %v55 = vrot.slane %v54, 2
  %v56 = vadd.f32 %v54, %v55
  %v57 = vrot.slane %v56, 1
  %v58 = vadd.f32 %v56, %v57
  %v59 = vsel %vm23, %v19, 0.0
  %v60 = vrot.slane %v59, 4
  %v61 = vadd.f32 %v59, %v60
  %v62 = vrot.slane %v61, 2
  %v63 = vadd.f32 %v61, %v62
  %v64 = vrot.slane %v63, 1
  %v65 = vadd.f32 %v63, %v64
  %v66 = vsel %vm23, %v20, 0.0
  %v67 = vrot.slane %v66, 4
  %v68 = vadd.f32 %v66, %v67
  %v69 = vrot.slane %v68, 2
  %v70 = vadd.f32 %v68, %v69
  %v71 = vrot.slane %v70, 1
  %v72 = vadd.f32 %v70, %v71
  %v73 = vsel %vm23, %v21, 0.0
  %v74 = vrot.slane %v73, 4
  %v75 = vadd.f32 %v73, %v74
  %v76 = vrot.slane %v75, 2
  %v77 = vadd.f32 %v75, %v76
  %v78 = vrot.slane %v77, 1
  %v79 = vadd.f32 %v77, %v78
  %vm88 = vcmask 1041409
  %v89 = vsel %vm88, %v37, %v30
  %vm90 = vcmask 1042434
  %v91 = vsel %vm90, %v44, %v89
  %vm92 = vcmask 1043459
  %v93 = vsel %vm92, %v51, %v91
  %vm94 = vcmask 1044484
  %v95 = vsel %vm94, %v58, %v93
  %vm96 = vcmask 1045509
  %v97 = vsel %vm96, %v65, %v95
  %vm98 = vcmask 1046534
  %v99 = vsel %vm98, %v72, %v97
  %vm100 = vcmask 1047559
  %v101 = vsel %vm100, %v79, %v99
  %v103 = vadd.f32 %v22, %v101
  %104 = vst.msk [vmem:[#allocation2] sm:$0xff] %vm23, %v103
  // Predicated region
  $region10: #{classifier_forward.2} parent=0 // pred_check
    %p105 = pneg %p8
  $region11: #{classifier_forward.2} parent=0 // pred_check_branch
    %107 = sbr.rel (%p105) target = $region13
  $region12: #{classifier_forward.2} parent=0 // pred_region
    %v108 = vld [vmem:[#allocation2] sm:$0xff]
    %v109 = vmul.f32 %v108, 0.125
    %110 = vst.msk [vmem:[%s1] sm:$0xff] %vm23, %v109
  $region13: #{classifier_forward.2} parent=0 // pred_fallthru
    _
  // Predicated region
  $region14: #{classifier_forward.2} parent=0 // pred_check
    _
  $region15: #{classifier_forward.2} parent=0 // pred_check_branch
    %112 = sbr.rel (0) target = $region17
  $region16: #{classifier_forward.2} parent=0 // pred_region
    _
  $region17: #{classifier_forward.2} parent=0 // pred_fallthru
    _
  // Predicated region
  $region18: #{classifier_forward.2} parent=0 // pred_check
    _
  $region19: #{classifier_forward.2} parent=0 // pred_check_branch
    %114 = sbr.rel (0) target = $region21
  $region20: #{classifier_forward.2} parent=0 // pred_region
    _
  $region21: #{classifier_forward.2} parent=0 // pred_fallthru
    _

// kernel: classifier_forward.3
$region0: #{classifier_forward.3}
  #allocation0 [shape = 'u32[]', space=smem, size = 0x4, offset = 0x4, fixed_abs, tag = 'smem constant byte address 0x4 - core index']
  #allocation1 [shape = 'u32[144,128]{1,0:T(1,128)}', space=vmem, size = 0x12000, scoped, tag = 'internal scratch']
  #allocation2 [shape = 'f32[8,128]{1,0:T(8,128)}', space=vmem, size = 0x1000, scoped, tag = 'scratch operand']
  %s0 = inlined_call_operand.vmem [shape: f32[8,32], index: 0, kind: input, shape index: {}]
  %s1 = inlined_call_operand.vmem [shape: f32[32,128], index: 1, kind: input, shape index: {}]
  %s2 = inlined_call_operand.vmem [shape: f32[1,128], index: 2, kind: input, shape index: {}]
  %s3 = inlined_call_operand.vmem [shape: f32[128,128], index: 3, kind: input, shape index: {}]
  %s4 = inlined_call_operand.vmem [shape: f32[1,128], index: 4, kind: input, shape index: {}]
  %s5 = inlined_call_operand.vmem [shape: f32[8,128], index: 5, kind: output, shape index: {}]
  %s6 = sld [smem:[#allocation0]]
  $region38: #{classifier_forward.3} parent=0
    _
  %s8 = ssub.s32 1, %s6
  %s9 = scalar_select 0, %s8, %s6
  // Predicated region
  $region2: #{classifier_forward.3} parent=0 // pred_check
    _
  $region3: #{classifier_forward.3} parent=0 // pred_check_branch
    %11 = sbr.rel (0) target = $region5
  $region4: #{classifier_forward.3} parent=0 // pred_region
    _
  $region5: #{classifier_forward.3} parent=0 // pred_fallthru
    _
  // Predicated region
  $region6: #{classifier_forward.3} parent=0 // pred_check
    _
  $region7: #{classifier_forward.3} parent=0 // pred_check_branch
    %13 = sbr.rel (0) target = $region9
  $region8: #{classifier_forward.3} parent=0 // pred_region
    _
  $region9: #{classifier_forward.3} parent=0 // pred_fallthru
    _
  // Predicated region
  $region10: #{classifier_forward.3} parent=0 // pred_check
    _
  $region11: #{classifier_forward.3} parent=0 // pred_check_branch
    %15 = sbr.rel (0) target = $region13
  $region12: #{classifier_forward.3} parent=0 // pred_region
    _
  $region13: #{classifier_forward.3} parent=0 // pred_fallthru
    _
  // Predicated region
  $region14: #{classifier_forward.3} parent=0 // pred_check
    _
  $region15: #{classifier_forward.3} parent=0 // pred_check_branch
    %17 = sbr.rel (0) target = $region17
  $region16: #{classifier_forward.3} parent=0 // pred_region
    _
  $region17: #{classifier_forward.3} parent=0 // pred_fallthru
    _
  // Predicated region
  $region18: #{classifier_forward.3} parent=0 // pred_check
    _
  $region19: #{classifier_forward.3} parent=0 // pred_check_branch
    %19 = sbr.rel (0) target = $region21
  $region20: #{classifier_forward.3} parent=0 // pred_region
    _
  $region21: #{classifier_forward.3} parent=0 // pred_fallthru
    _
  %p20 = scmp.eq.s32.totalorder 0, 0
  // Predicated region
  $region22: #{classifier_forward.3} parent=0 // pred_check
    %p21 = pneg %p20
  $region23: #{classifier_forward.3} parent=0 // pred_check_branch
    %23 = sbr.rel (%p21) target = $region25
  $region24: #{classifier_forward.3} parent=0 // pred_region
    %24 = vst [vmem:[#allocation2] sm:$0xff] 0.0
  $region25: #{classifier_forward.3} parent=0 // pred_fallthru
    _
  %v25 = vld [vmem:[%s0] sm:$0xff]
  %v26 = vld [vmem:[%s1] sm:$0xff]
  %v27 = vld [vmem:[%s1 + $0x8] sm:$0xff]
  %v28 = vld [vmem:[%s1 + $0x10] sm:$0xff]
  %v29 = vld [vmem:[%s1 + $0x18] sm:$0xff]
  %v30 = vld [vmem:[%s2] sm:$0x1]
  %v32 = vlaneseq
  %v33 = vshrl.u32 %v32, 7
  %v34 = vsub.s32 0, %v33
  %v35 = vrot.slane %v30, %v34
  %vm37 = vcmask 261120
  %v39 = vsel %vm37, %v25, 0
  %41 = vmatprep.subr.mxu0 0.0
  %42 = vmatpush1.msra.mxu0 %v26
  %43 = vmatprep.subr.mxu0 0.0
  %44 = vmatpush1.msra.mxu0 %v27
  %45 = vmatprep.subr.mxu0 0.0
  %46 = vmatpush1.msra.mxu0 %v28
  %47 = vmatprep.subr.mxu0 0.0
  %48 = vmatpush1.msra.mxu0 %v29
  %49 = vmatprep.subr.mxu0 0.0
  %50 = vmatpush1.msra.mxu0 0.0
  %51 = vmatprep.subr.mxu0 0.0
  %52 = vmatpush1.msra.mxu0 0.0
  %53 = vmatprep.subr.mxu0 0.0
  %54 = vmatpush1.msra.mxu0 0.0
  %55 = vmatprep.subr.mxu0 0.0
  %56 = vmatpush1.msra.mxu0 0.0
  %57 = vmatprep.subr.mxu0 0.0
  %58 = vmatpush1.msra.mxu0 0.0
  %59 = vmatprep.subr.mxu0 0.0
  %60 = vmatpush1.msra.mxu0 0.0
  %61 = vmatprep.subr.mxu0 0.0
  %62 = vmatpush1.msra.mxu0 0.0
  %63 = vmatprep.subr.mxu0 0.0
  %64 = vmatpush1.msra.mxu0 0.0
  %65 = vmatprep.subr.mxu0 0.0
  %66 = vmatpush1.msra.mxu0 0.0
  %67 = vmatprep.subr.mxu0 0.0
  %68 = vmatpush1.msra.mxu0 0.0
  %69 = vmatprep.subr.mxu0 0.0
  %70 = vmatpush1.msra.mxu0 0.0
  %71 = vmatprep.subr.mxu0 0.0
  %72 = vmatpush1.msra.mxu0 0.0
  %73 = vmatprep.subr.mxu0 0.0
  %74 = vmatpush1.msra.mxu0 0.0
  %75 = vmatprep.subr.mxu0 0.0
  %76 = vmatpush1.msra.mxu0 0.0
  %77 = vmatprep.subr.mxu0 0.0
  %78 = vmatpush1.msra.mxu0 0.0
  %79 = vmatprep.subr.mxu0 0.0
  %80 = vmatpush1.msra.mxu0 0.0
  %81 = vmatprep.subr.mxu0 0.0
  %82 = vmatpush1.msra.mxu0 0.0
  %83 = vmatprep.subr.mxu0 0.0
  %84 = vmatpush1.msra.mxu0 0.0
  %85 = vmatprep.subr.mxu0 0.0
  %86 = vmatpush1.msra.mxu0 0.0
  %87 = vmatprep.subr.mxu0 0.0
  %88 = vmatpush1.msra.mxu0 0.0
  %89 = vmatprep.subr.mxu0 0.0
  %90 = vmatpush1.msra.mxu0 0.0
  %91 = vmatprep.subr.mxu0 0.0
  %92 = vmatpush1.msra.mxu0 0.0
  %93 = vmatprep.subr.mxu0 0.0
  %94 = vmatpush1.msra.mxu0 0.0
  %95 = vmatprep.subr.mxu0 0.0
  %96 = vmatpush1.msra.mxu0 0.0
  %97 = vmatprep.subr.mxu0 0.0
  %98 = vmatpush1.msra.mxu0 0.0
  %99 = vmatprep.subr.mxu0 0.0
  %100 = vmatpush1.msra.mxu0 0.0
  %101 = vmatprep.subr.mxu0 0.0
  %102 = vmatpush1.msra.mxu0 0.0
  %103 = vmatprep.subr.mxu0 0.0
  %104 = vmatpush1.msra.mxu0 0.0
  %105 = vmatprep.mubr.f32.mxu0 0.0
  %106 = vmatmul.mubr.f32.gmra.mrb[0].mxu0 %v39
  %v107 = vpop.f32.mrb[0].mxu0
  %v108 = vadd.f32 %v35, %v107
  %v109 = vpop.f32.mrb[0].mxu0
  %110 = vdwg.mxu0
  %v111 = vmax.f32 %v108, 0.0
  %v112 = vld [vmem:[#allocation2] sm:$0xff]
  %v113 = vld [vmem:[%s3] sm:$0xff]
  %v114 = vld [vmem:[%s3 + $0x8] sm:$0xff]
  %v115 = vld [vmem:[%s3 + $0x10] sm:$0xff]
  %v116 = vld [vmem:[%s3 + $0x18] sm:$0xff]
  %v117 = vld [vmem:[%s3 + $0x20] sm:$0xff]
  %v118 = vld [vmem:[%s3 + $0x28] sm:$0xff]
  %v119 = vld [vmem:[%s3 + $0x30] sm:$0xff]
  %v120 = vld [vmem:[%s3 + $0x38] sm:$0xff]
  %v121 = vld [vmem:[%s3 + $0x40] sm:$0xff]
  %v122 = vld [vmem:[%s3 + $0x48] sm:$0xff]
  %v123 = vld [vmem:[%s3 + $0x50] sm:$0xff]
  %v124 = vld [vmem:[%s3 + $0x58] sm:$0xff]
  %v125 = vld [vmem:[%s3 + $0x60] sm:$0xff]
  %v126 = vld [vmem:[%s3 + $0x68] sm:$0xff]
  %v127 = vld [vmem:[%s3 + $0x70] sm:$0xff]
  %v128 = vld [vmem:[%s3 + $0x78] sm:$0xff]
  %129 = vmatprep.subr.mxu0 0.0
  %130 = vmatpush1.msra.mxu0 %v113
  %131 = vmatprep.subr.mxu0 0.0
  %132 = vmatpush1.msra.mxu0 %v114
  %133 = vmatprep.subr.mxu0 0.0
  %134 = vmatpush1.msra.mxu0 %v115
  %135 = vmatprep.subr.mxu0 0.0
  %136 = vmatpush1.msra.mxu0 %v116
  %137 = vmatprep.subr.mxu0 0.0
  %138 = vmatpush1.msra.mxu0 %v117
  %139 = vmatprep.subr.mxu0 0.0
  %140 = vmatpush1.msra.mxu0 %v118
  %141 = vmatprep.subr.mxu0 0.0
  %142 = vmatpush1.msra.mxu0 %v119
  %143 = vmatprep.subr.mxu0 0.0
  %144 = vmatpush1.msra.mxu0 %v120
  %145 = vmatprep.subr.mxu0 0.0
  %146 = vmatpush1.msra.mxu0 %v121
  %147 = vmatprep.subr.mxu0 0.0
  %148 = vmatpush1.msra.mxu0 %v122
  %149 = vmatprep.subr.mxu0 0.0
  %150 = vmatpush1.msra.mxu0 %v123
  %151 = vmatprep.subr.mxu0 0.0
  %152 = vmatpush1.msra.mxu0 %v124
  %153 = vmatprep.subr.mxu0 0.0
  %154 = vmatpush1.msra.mxu0 %v125
  %155 = vmatprep.subr.mxu0 0.0
  %156 = vmatpush1.msra.mxu0 %v126
  %157 = vmatprep.subr.mxu0 0.0
  %158 = vmatpush1.msra.mxu0 %v127
  %159 = vmatprep.subr.mxu0 0.0
  %160 = vmatpush1.msra.mxu0 %v128
  %161 = vmatprep.subr.mxu0 0.0
  %162 = vmatpush1.msra.mxu0 0.0
  %163 = vmatprep.subr.mxu0 0.0
  %164 = vmatpush1.msra.mxu0 0.0
  %165 = vmatprep.subr.mxu0 0.0
  %166 = vmatpush1.msra.mxu0 0.0
  %167 = vmatprep.subr.mxu0 0.0
  %168 = vmatpush1.msra.mxu0 0.0
  %169 = vmatprep.subr.mxu0 0.0
  %170 = vmatpush1.msra.mxu0 0.0
  %171 = vmatprep.subr.mxu0 0.0
  %172 = vmatpush1.msra.mxu0 0.0
  %173 = vmatprep.subr.mxu0 0.0
  %174 = vmatpush1.msra.mxu0 0.0
  %175 = vmatprep.subr.mxu0 0.0
  %176 = vmatpush1.msra.mxu0 0.0
  %177 = vmatprep.subr.mxu0 0.0
  %178 = vmatpush1.msra.mxu0 0.0
  %179 = vmatprep.subr.mxu0 0.0
  %180 = vmatpush1.msra.mxu0 0.0
  %181 = vmatprep.subr.mxu0 0.0
  %182 = vmatpush1.msra.mxu0 0.0
  %183 = vmatprep.subr.mxu0 0.0
  %184 = vmatpush1.msra.mxu0 0.0
  %185 = vmatprep.subr.mxu0 0.0
  %186 = vmatpush1.msra.mxu0 0.0
  %187 = vmatprep.subr.mxu0 0.0
  %188 = vmatpush1.msra.mxu0 0.0
  %189 = vmatprep.subr.mxu0 0.0
  %190 = vmatpush1.msra.mxu0 0.0
  %191 = vmatprep.subr.mxu0 0.0
  %192 = vmatpush1.msra.mxu0 0.0
  %193 = vmatprep.mubr.f32.mxu0 0.0
  %194 = vmatmul.mubr.f32.gmra.mrb[0].mxu0 %v111
  %v195 = vpop.f32.mrb[0].mxu0
  %v196 = vadd.f32 0.0, %v195
  %v197 = vpop.f32.mrb[0].mxu0
  %198 = vdwg.mxu0
  %v199 = vadd.f32 %v112, %v196
  %200 = vst [vmem:[#allocation2] sm:$0xff] %v199
  // Predicated region
  $region26: #{classifier_forward.3} parent=0 // pred_check
    %p201 = pneg %p20
  $region27: #{classifier_forward.3} parent=0 // pred_check_branch
    %203 = sbr.rel (%p201) target = $region29
  $region28: #{classifier_forward.3} parent=0 // pred_region
    %v204 = vld [vmem:[#allocation2] sm:$0xff]
    %v205 = vld [vmem:[%s4] sm:$0x1]
    %v207 = vlaneseq
    %v208 = vshrl.u32 %v207, 7
    %v209 = vsub.s32 0, %v208
    %v210 = vrot.slane %v205, %v209
    %v212 = vadd.f32 %v204, %v210
    %213 = vst [vmem:[%s5] sm:$0xff] %v212
  $region29: #{classifier_forward.3} parent=0 // pred_fallthru
    _
  // Predicated region
  $region30: #{classifier_forward.3} parent=0 // pred_check
    _
  $region31: #{classifier_forward.3} parent=0 // pred_check_branch
    %215 = sbr.rel (0) target = $region33
  $region32: #{classifier_forward.3} parent=0 // pred_region
    _
  $region33: #{classifier_forward.3} parent=0 // pred_fallthru
    _
  // Predicated region
  $region34: #{classifier_forward.3} parent=0 // pred_check
    _
  $region35: #{classifier_forward.3} parent=0 // pred_check_branch
    %217 = sbr.rel (0) target = $region37
  $region36: #{classifier_forward.3} parent=0 // pred_region
    _
  $region37: #{classifier_forward.3} parent=0 // pred_fallthru
    _

</llo_original>
